<compile_context>
chip_gen: v6e
topology: v6e:2x2x1
jax: 0.10.0
libtpu: 0.0.40
codegen_flags: <defaults>
</compile_context>

<pallas_src>
import functools

import jax
import jax.numpy as jnp
import numpy as np
from jax.experimental import pallas as pl
from jax.experimental.pallas import tpu as pltpu

_MIB = 1024 * 1024


# ----------------------------- sizing helpers -----------------------------

def _round_up(n, m):
    return ((n + m - 1) // m) * m


def _itemsize(dtype):
    return np.dtype(dtype).itemsize


def _vmem_limit_bytes():
    """Scoped-VMEM limit: ~75% of physical VMEM (64 MiB fallback -> 48 MiB),
    always at/above the 16/32 MiB defaults and within v7x's 64 MiB physical."""
    cap = 64 * _MIB
    try:
        info = pltpu.get_tpu_info()
        cap = int(getattr(info, "vmem_capacity_bytes", cap))
    except Exception:
        pass
    cap = max(32 * _MIB, min(cap, 128 * _MIB))
    return (cap * 3) // 4


def _pick_feature_block(feat):
    """Output-feature tile: a multiple of 128 (lane-dense stores) or the full dim."""
    if feat % 128 != 0:
        return feat
    for cand in (512, 256, 128):
        if feat % cand == 0:
            return cand
    return feat


def _pick_row_block(rows, per_row_bytes, budget_bytes):
    """Largest row tile whose working set fits the budget; keep >=2 grid steps
    along the parallel row axis whenever the row count allows it (megacore)."""
    rows8 = _round_up(max(rows, 1), 8)
    rb = 8
    for cand in (1024, 512, 256, 128, 64, 32, 16, 8):
        if cand * per_row_bytes <= budget_bytes:
            rb = cand
            break
    while rb > 8 and rb >= rows8:
        rb //= 2
    return rb, _round_up(rows8, rb)


def _pad_rows(x2, rows_padded):
    rows = x2.shape[0]
    if rows_padded == rows:
        return x2
    return jnp.pad(x2, ((0, rows_padded - rows), (0, 0)))


# --------------------------------- kernels ---------------------------------

def _normalize_rows_f32(x, eps, inv_nm1, approx):
    """(x - mean) / (std_unbiased + eps) on an (R, F) tile, f32 math.
    Matches the module: unbiased std, eps added AFTER the sqrt."""
    f = x.shape[-1]
    mean = jnp.sum(x, axis=-1, keepdims=True) * (1.0 / f)
    diff = x - mean
    var = jnp.sum(diff * diff, axis=-1, keepdims=True) * inv_nm1
    denom = jnp.sqrt(var) + eps
    inv = pl.reciprocal(denom, approx=True) if approx else 1.0 / denom
    return diff * inv


def _ln_kernel(eps, inv_nm1, x_ref, a2_ref, b2_ref, o_ref):
    x = x_ref[...].astype(jnp.float32)
    normed = _normalize_rows_f32(x, eps, inv_nm1, approx=False)
    gamma = a2_ref[...].astype(jnp.float32)
    beta = b2_ref[...].astype(jnp.float32)
    o_ref[...] = (gamma * normed + beta).astype(o_ref.dtype)


def _fused_kernel(eps, inv_nm1, approx,
                  x_ln_ref, x_res_ref, w_ref, b_ref, o_ref, normed_ref):
    # LayerNorm once per row tile (at the first N tile); reused across all N tiles.
    @pl.when(pl.program_id(1) == 0)
    def _():
        x = x_ln_ref[...].astype(jnp.float32)
        normed_ref[...] = _normalize_rows_f32(x, eps, inv_nm1, approx).astype(normed_ref.dtype)

    proj = jnp.dot(normed_ref[...], w_ref[...], preferred_element_type=jnp.float32)
    o_ref[...] = (x_res_ref[...].astype(jnp.float32) + proj
                  + b_ref[...].astype(jnp.float32)).astype(o_ref.dtype)


# -------------------------------- wrappers ---------------------------------

def layer_norm_pallas(x, a2, b2, *, eps=1e-6):
    orig = x.shape
    feat = orig[-1]
    rows = int(np.prod(orig[:-1])) if len(orig) > 1 else 1
    x2 = x.reshape(rows, feat)

    vmem_limit = _vmem_limit_bytes()
    xb = _itemsize(x.dtype)
    per_row = 2 * feat * xb + 2 * feat * xb + 2 * feat * 4   # in + out (2x buffered) + f32 temps
    rb, rows_padded = _pick_row_block(rows, per_row, (vmem_limit * 3) // 4)
    x2p = _pad_rows(x2, rows_padded)
    inv_nm1 = 1.0 / max(feat - 1, 1)

    out = pl.pallas_call(
        functools.partial(_ln_kernel, float(eps), float(inv_nm1)),
        out_shape=jax.ShapeDtypeStruct((rows_padded, feat), x.dtype),
        grid_spec=pltpu.PrefetchScalarGridSpec(
            num_scalar_prefetch=0,
            grid=(rows_padded // rb,),
            in_specs=[
                pl.BlockSpec((rb, feat), lambda i: (i, 0)),
                pl.BlockSpec((1, feat), lambda i: (0, 0)),    # gamma (constant index)
                pl.BlockSpec((1, feat), lambda i: (0, 0)),    # beta  (constant index)
            ],
            out_specs=pl.BlockSpec((rb, feat), lambda i: (i, 0)),
        ),
        compiler_params=pltpu.CompilerParams(
            dimension_semantics=("parallel",),
            vmem_limit_bytes=vmem_limit,
        ),
    )(x2p, a2.reshape(1, feat), b2.reshape(1, feat))

    if rows_padded != rows:
        out = out[:rows]
    return out.reshape(orig)


def residual_skip_connection(x, sublayer, a2, b2, *, eps=1e-6):
    """Generic path, exact module API: x + dropout(sublayer(norm(x))) with
    dropout == identity (eval). The residual add stays in plain JAX so XLA
    fuses it with the sublayer epilogue (no extra pallas_call / HBM round trip)."""
    return x + sublayer(layer_norm_pallas(x, a2, b2, eps=eps))


def fold_linear_params(a2, b2, w, b, *, mm_dtype=jnp.bfloat16):
    """Fold LayerNorm gamma/beta and the linear bias into the weight (done ONCE):
       norm(x) @ w.T + b == ((x-mean)*inv_std) @ (a2[:,None] * w.T) + (b2 @ w.T + b)."""
    wt = jnp.transpose(w).astype(jnp.float32)                       # (F_in, F_out)
    w_fold = (a2.astype(jnp.float32)[:, None] * wt).astype(mm_dtype)
    b_fold = (b2.astype(jnp.float32) @ wt + b.astype(jnp.float32)).astype(jnp.float32)
    return w_fold, b_fold


def residual_ln_linear_fused(x, w_fold, b_fold, *, eps=1e-6, approx_rcp=True):
    """Fused fast path: out = x + LayerNorm(x) @ W' + b', single pallas_call
    on a (row tile) x (out-feature tile) grid."""
    orig = x.shape
    feat = orig[-1]
    rows = int(np.prod(orig[:-1])) if len(orig) > 1 else 1
    assert w_fold.shape == (feat, feat), "sublayer must map size -> size"
    x2 = x.reshape(rows, feat)
    out_dtype = x.dtype
    mm_dtype = w_fold.dtype

    tn = _pick_feature_block(feat)
    nt = feat // tn

    vmem_limit = _vmem_limit_bytes()
    xb, ob, mb = _itemsize(x.dtype), _itemsize(out_dtype), _itemsize(mm_dtype)
    fixed = 2 * feat * tn * mb + 2 * tn * 4      # weight slice + bias slice (double-buffered)
    per_row = (2 * feat * xb                     # x rows (LN / matmul LHS), double-buffered
               + 2 * tn * xb                     # x residual slice
               + feat * mb                       # normed VMEM scratch
               + 2 * tn * ob                     # output tile
               + 2 * feat * 4)                   # f32 temporaries in the LN prologue
    budget = max((vmem_limit * 3) // 4 - fixed, 8 * per_row)
    rb, rows_padded = _pick_row_block(rows, per_row, budget)
    x2p = _pad_rows(x2, rows_padded)
    inv_nm1 = 1.0 / max(feat - 1, 1)

    out = pl.pallas_call(
        functools.partial(_fused_kernel, float(eps), float(inv_nm1), bool(approx_rcp)),
        out_shape=jax.ShapeDtypeStruct((rows_padded, feat), out_dtype),
        grid_spec=pltpu.PrefetchScalarGridSpec(
            num_scalar_prefetch=0,
            grid=(rows_padded // rb, nt),
            in_specs=[
                pl.BlockSpec((rb, feat), lambda i, j: (i, 0)),  # x rows (fetched once per row tile)
                pl.BlockSpec((rb, tn), lambda i, j: (i, j)),    # x residual slice (lane-aligned)
                pl.BlockSpec((feat, tn), lambda i, j: (0, j)),  # folded W^T slice (bf16)
                pl.BlockSpec((1, tn), lambda i, j: (0, j)),     # folded bias slice
            ],
            out_specs=pl.BlockSpec((rb, tn), lambda i, j: (i, j)),
            scratch_shapes=[pltpu.VMEM((rb, feat), mm_dtype)],  # normalized rows, reused over j
        ),
        compiler_params=pltpu.CompilerParams(
            dimension_semantics=("parallel", "arbitrary"),
            vmem_limit_bytes=vmem_limit,
        ),
    )(x2p, x2p, w_fold, b_fold.reshape(1, feat))

    if rows_padded != rows:
        out = out[:rows]
    return out.reshape(orig)


def make_fused_residual_ln_linear(a2, b2, w, b, *, eps=1e-6, mm_dtype=jnp.bfloat16,
                                  approx_rcp=None):
    """Factory: fold the parameters ONCE (hoisted out of the hot path) and return
    a jitted forward for sublayer == Linear(size, size)."""
    if approx_rcp is None:
        # approx-reciprocal error is hidden under bf16 matmul noise; keep exact for f32.
        approx_rcp = np.dtype(mm_dtype) == np.dtype(jnp.bfloat16)
    w_fold, b_fold = fold_linear_params(a2, b2, w, b, mm_dtype=mm_dtype)
    fwd = jax.jit(functools.partial(residual_ln_linear_fused,
                                    eps=eps, approx_rcp=bool(approx_rcp)))
    return lambda x: fwd(x, w_fold, b_fold)


# ----------------------------------- demo -----------------------------------

if __name__ == "__main__":
    batch, seq, size = 2, 8, 32      # NOTE: size=32 is lane-starved (32/128 lanes); demo only.
    eps = 1e-6

    key = jax.random.PRNGKey(0)
    kx, kw, kb = jax.random.split(key, 3)
    x = jax.random.normal(kx, (batch, seq, size), jnp.float32)

    # Non-trivial gamma/beta so the folding path is actually exercised
    # (module init would be ones/zeros).
    a2 = 1.0 + 0.1 * jax.random.normal(jax.random.PRNGKey(1), (size,), jnp.float32)
    b2 = 0.1 * jax.random.normal(jax.random.PRNGKey(2), (size,), jnp.float32)

    # Example sublayer: Linear(size, size).
    bound = float(np.sqrt(1.0 / size))
    w = jax.random.uniform(kw, (size, size), jnp.float32, -bound, bound)
    b = jax.random.uniform(kb, (size,), jnp.float32, -bound, bound)

    def sublayer(z):
        return z @ w.T + b

    def ref_forward(xx):
        mean = jnp.mean(xx, axis=-1, keepdims=True)
        std = jnp.std(xx, axis=-1, keepdims=True, ddof=1)     # torch.std default: unbiased
        normed = a2 * (xx - mean) / (std + eps) + b2
        return xx + (normed @ w.T + b)                        # dropout identity (eval)

    ref = ref_forward(x)

    # Generic path: Pallas LayerNorm + arbitrary JAX sublayer + JAX residual add.
    out_generic = jax.block_until_ready(residual_skip_connection(x, sublayer, a2, b2, eps=eps))
    np.testing.assert_allclose(np.asarray(out_generic), np.asarray(ref), rtol=2e-3, atol=2e-3)

    # Fused fast path: f32 MXU operands (tight check) and bf16 MXU operands (default).
    fused_f32 = make_fused_residual_ln_linear(a2, b2, w, b, eps=eps, mm_dtype=jnp.float32)
    fused_bf16 = make_fused_residual_ln_linear(a2, b2, w, b, eps=eps)   # bf16 default
    out_f32 = jax.block_until_ready(fused_f32(x))
    out_bf16 = jax.block_until_ready(fused_bf16(x))

    assert out_generic.shape == x.shape
    assert out_f32.shape == x.shape and out_bf16.shape == x.shape
    np.testing.assert_allclose(np.asarray(out_f32), np.asarray(ref), rtol=2e-3, atol=2e-3)
    np.testing.assert_allclose(np.asarray(out_bf16), np.asarray(ref), rtol=5e-2, atol=5e-2)

    print("KERNEL_OK")
</pallas_src>

<mosaic_0001>
module attributes {stable_mosaic.version = 11 : i64} {
  func.func @_ln_kernel(%arg0: i32, %arg1: memref<8x32xf32, #tpu.memory_space<vmem>>, %arg2: memref<1x32xf32, #tpu.memory_space<vmem>>, %arg3: memref<1x32xf32, #tpu.memory_space<vmem>>, %arg4: memref<8x32xf32, #tpu.memory_space<vmem>>) attributes {dimension_semantics = [#tpu.dimension_semantics<parallel>], iteration_bounds = array<i64: 2>, scalar_prefetch = 0 : i64, scratch_operands = 0 : i64, tpu.core_type = #tpu.core_type<tc>, window_params = [{transform_indices = @transform_0, window_bounds = array<i64: 8, 32>}, {pipeline_mode = #tpu.pipeline_mode<synchronous>, transform_indices = @transform_1, window_bounds = array<i64: 1, 32>}, {pipeline_mode = #tpu.pipeline_mode<synchronous>, transform_indices = @transform_2, window_bounds = array<i64: 1, 32>}, {transform_indices = @transform_3, window_bounds = array<i64: 8, 32>}]} {
    %c0 = arith.constant 0 : index
    %c0_0 = arith.constant 0 : index
    %0 = vector.load %arg1[%c0, %c0_0] : memref<8x32xf32, #tpu.memory_space<vmem>>, vector<8x32xf32>
    %cst = arith.constant dense<0.000000e+00> : vector<8xf32>
    %1 = vector.multi_reduction <add>, %0, %cst [1] : vector<8x32xf32> to vector<8xf32>
    %2 = vector.shape_cast %1 : vector<8xf32> to vector<8x1xf32>
    %cst_1 = arith.constant 3.125000e-02 : f32
    %3 = vector.broadcast %cst_1 : f32 to vector<8x1xf32>
    %4 = arith.mulf %2, %3 : vector<8x1xf32>
    %5 = vector.broadcast %4 : vector<8x1xf32> to vector<8x32xf32>
    %6 = arith.subf %0, %5 : vector<8x32xf32>
    %7 = arith.mulf %6, %6 : vector<8x32xf32>
    %cst_2 = arith.constant dense<0.000000e+00> : vector<8xf32>
    %8 = vector.multi_reduction <add>, %7, %cst_2 [1] : vector<8x32xf32> to vector<8xf32>
    %9 = vector.shape_cast %8 : vector<8xf32> to vector<8x1xf32>
    %cst_3 = arith.constant 0.0322580636 : f32
    %10 = vector.broadcast %cst_3 : f32 to vector<8x1xf32>
    %11 = arith.mulf %9, %10 : vector<8x1xf32>
    %12 = math.sqrt %11 : vector<8x1xf32>
    %cst_4 = arith.constant 9.99999997E-7 : f32
    %13 = vector.broadcast %cst_4 : f32 to vector<8x1xf32>
    %14 = arith.addf %12, %13 : vector<8x1xf32>
    %cst_5 = arith.constant 1.000000e+00 : f32
    %15 = vector.broadcast %cst_5 : f32 to vector<8x1xf32>
    %16 = arith.divf %15, %14 : vector<8x1xf32>
    %17 = vector.broadcast %16 : vector<8x1xf32> to vector<8x32xf32>
    %18 = arith.mulf %6, %17 : vector<8x32xf32>
    %c0_6 = arith.constant 0 : index
    %c0_7 = arith.constant 0 : index
    %19 = vector.load %arg2[%c0_6, %c0_7] : memref<1x32xf32, #tpu.memory_space<vmem>>, vector<1x32xf32>
    %c0_8 = arith.constant 0 : index
    %c0_9 = arith.constant 0 : index
    %20 = vector.load %arg3[%c0_8, %c0_9] : memref<1x32xf32, #tpu.memory_space<vmem>>, vector<1x32xf32>
    %21 = vector.broadcast %19 : vector<1x32xf32> to vector<8x32xf32>
    %22 = arith.mulf %21, %18 : vector<8x32xf32>
    %23 = vector.broadcast %20 : vector<1x32xf32> to vector<8x32xf32>
    %24 = arith.addf %22, %23 : vector<8x32xf32>
    %c0_10 = arith.constant 0 : index
    %c0_11 = arith.constant 0 : index
    %25 = vector.load %arg4[%c0_10, %c0_11] : memref<8x32xf32, #tpu.memory_space<vmem>>, vector<8x32xf32>
    tpu.vector_store %arg4[%c0_10, %c0_11], %24 {strides = array<i32>} : memref<8x32xf32, #tpu.memory_space<vmem>>, vector<8x32xf32>,
    return
  }
  func.func @transform_0(%arg0: i32) -> (i32, i32) {
    %c0_i32 = arith.constant 0 : i32
    %c0_i32_0 = arith.constant 0 : i32
    return %arg0, %c0_i32 : i32, i32
  }
  func.func @transform_1(%arg0: i32) -> (i32, i32) {
    %c0_i32 = arith.constant 0 : i32
    %c0_i32_0 = arith.constant 0 : i32
    %c0_i32_1 = arith.constant 0 : i32
    return %c0_i32, %c0_i32_0 : i32, i32
  }
  func.func @transform_2(%arg0: i32) -> (i32, i32) {
    %c0_i32 = arith.constant 0 : i32
    %c0_i32_0 = arith.constant 0 : i32
    %c0_i32_1 = arith.constant 0 : i32
    return %c0_i32, %c0_i32_0 : i32, i32
  }
  func.func @transform_3(%arg0: i32) -> (i32, i32) {
    %c0_i32 = arith.constant 0 : i32
    %c0_i32_0 = arith.constant 0 : i32
    return %arg0, %c0_i32 : i32, i32
  }
}

</mosaic_0001>

<llo_original>
// kernel: tpu_custom_call.1
$region0: #{tpu_custom_call.1}
  #allocation0 [shape = 'u32[]', space=smem, size = 0x4, offset = 0x4, fixed_abs, tag = 'smem constant byte address 0x4 - core index']
  #allocation1 [shape = 'u32[144,128]{1,0:T(1,128)}', space=vmem, size = 0x12000, scoped, tag = 'internal scratch']
  %s0 = inlined_call_operand.hbm [shape: f32[16,32], index: 0, kind: input, shape index: {}]
  %s1 = inlined_call_operand.vmem [shape: f32[1,32], index: 1, kind: input, shape index: {}]
  %s2 = inlined_call_operand.vmem [shape: f32[1,32], index: 2, kind: input, shape index: {}]
  %s3 = inlined_call_operand.hbm [shape: f32[16,32], index: 3, kind: output, shape index: {}]
  %s4 = sld [smem:[#allocation0]]
  $region49: #{tpu_custom_call.1} parent=0
    _
  %s6 = ssub.s32 1, %s4
  %s7 = scalar_select 0, %s6, %s4
  $region1: #{tpu_custom_call.1} parent=0
    #allocation2 [shape = 'u8[8192]{0}', space=vmem, size = 0x2000, scoped, tag = 'input window, operand 0']
    #allocation3 [shape = 's32[2]{0}', space=sflag, size = 0x8, scoped, tag = 'scoped memory for tpu_custom_call.1']
    #allocation4 [shape = 's32[2]{0}', space=sflag, size = 0x8, scoped, tag = 'scoped memory for tpu_custom_call.1']
    #allocation5 [shape = 'u8[8192]{0}', space=vmem, size = 0x2000, scoped, tag = 'output window, operand 0']
    %8 = vsyncpa [#allocation3], 0
    %s9 = scalar_lea.sflag [#allocation3], 1
    %10 = vsyncpa %s9, 0
    %11 = vsyncpa [#allocation4], 0
    %s12 = scalar_lea.sflag [#allocation4], 1
    %13 = vsyncpa %s12, 0
    loop: start=0, step=1, limit=4
    $region2: #{tpu_custom_call.1} parent=1 // loop_pre_header
      _
    $region3: #{tpu_custom_call.1} parent=1 // loop_header
      %s15 = sphi 0, %s19
      %p16 = scmp.ge.s32.totalorder %s15, 4
      %s25 = sphi 0, %s27
      %s28 = sphi 0, %s25
      %s29 = sphi 0, %s28
      %s45 = sphi 0, %s29
      %s49 = sphi 0, %s49
      %s51 = sphi 0, %s49
      %s52 = sphi 0, %s51
      %s66 = sphi 0, %s52
      %s70 = sphi 0, %s70
      %s72 = sphi 0, %s70
      %s73 = sphi 0, %s72
      %s87 = sphi 0, %s73
      %s93 = sphi 0, %s95
      %s96 = sphi 0, %s93
      %s97 = sphi 0, %s96
      %s113 = sphi 0, %s97
    $region4: #{tpu_custom_call.1} parent=1 // loop_header_branch
      %18 = sbr.rel (%p16) target = $region8
    $region5: #{tpu_custom_call.1} parent=1 // loop_body
      %s20 = ssub.s32 %s15, 1
      %s21 = ssub.s32 %s15, 2
      %s22 = sadd.s32 %s15, 1
      %s23 = ssub.s32 %s15, %s22
      %p24 = scmp.eq.s32.totalorder %s23, 0
      %s26 = sadd.s32 %s25, 1
      %s27 = scalar_select %p24, %s25, %s26
      %p30 = pneg %p24
      %p31 = scmp.eq.s32.totalorder %s15, 1
      %p32 = por %p30, %p31
      %p33 = scmp.ne.s32.totalorder %s25, %s28
      %p34 = scmp.eq.s32.totalorder %s15, 0
      %p35 = por %p33, %p34
      %p36 = scmp.ne.s32.totalorder %s25, %s28
      %p37 = scmp.eq.s32.totalorder %s20, 1
      %p38 = por %p36, %p37
      %p39 = scmp.ne.s32.totalorder %s28, %s29
      %p40 = scmp.eq.s32.totalorder %s20, 0
      %p41 = por %p39, %p40
      %p42 = scmp.ne.s32.totalorder %s28, %s29
      %p43 = scmp.eq.s32.totalorder %s21, 1
      %p44 = por %p42, %p43
      %p46 = scmp.ne.s32.totalorder %s29, %s45
      %p47 = scmp.eq.s32.totalorder %s21, 0
      %p48 = por %p46, %p47
      %s50 = sadd.s32 %s49, 1
      %p53 = scmp.eq.s32.totalorder %s15, 1
      %p54 = scmp.ne.s32.totalorder %s49, %s51
      %p55 = scmp.eq.s32.totalorder %s15, 0
      %p56 = por %p54, %p55
      %p57 = scmp.ne.s32.totalorder %s49, %s51
      %p58 = scmp.eq.s32.totalorder %s20, 1
      %p59 = por %p57, %p58
      %p60 = scmp.ne.s32.totalorder %s51, %s52
      %p61 = scmp.eq.s32.totalorder %s20, 0
      %p62 = por %p60, %p61
      %p63 = scmp.ne.s32.totalorder %s51, %s52
      %p64 = scmp.eq.s32.totalorder %s21, 1
      %p65 = por %p63, %p64
      %p67 = scmp.ne.s32.totalorder %s52, %s66
      %p68 = scmp.eq.s32.totalorder %s21, 0
      %p69 = por %p67, %p68
      %s71 = sadd.s32 %s70, 1
      %p74 = scmp.eq.s32.totalorder %s15, 1
      %p75 = scmp.ne.s32.totalorder %s70, %s72
      %p76 = scmp.eq.s32.totalorder %s15, 0
      %p77 = por %p75, %p76
      %p78 = scmp.ne.s32.totalorder %s70, %s72
      %p79 = scmp.eq.s32.totalorder %s20, 1
      %p80 = por %p78, %p79
      %p81 = scmp.ne.s32.totalorder %s72, %s73
      %p82 = scmp.eq.s32.totalorder %s20, 0
      %p83 = por %p81, %p82
      %p84 = scmp.ne.s32.totalorder %s72, %s73
      %p85 = scmp.eq.s32.totalorder %s21, 1
      %p86 = por %p84, %p85
      %p88 = scmp.ne.s32.totalorder %s73, %s87
      %p89 = scmp.eq.s32.totalorder %s21, 0
      %p90 = por %p88, %p89
      %s91 = ssub.s32 %s15, %s22
      %p92 = scmp.eq.s32.totalorder %s91, 0
      %s94 = sadd.s32 %s93, 1
      %s95 = scalar_select %p92, %s93, %s94
      %p98 = pneg %p92
      %p99 = scmp.eq.s32.totalorder %s15, 1
      %p100 = por %p98, %p99
      %p101 = scmp.ne.s32.totalorder %s93, %s96
      %p102 = scmp.eq.s32.totalorder %s15, 0
      %p103 = por %p101, %p102
      %p104 = scmp.ne.s32.totalorder %s93, %s96
      %p105 = scmp.eq.s32.totalorder %s20, 1
      %p106 = por %p104, %p105
      %p107 = scmp.ne.s32.totalorder %s96, %s97
      %p108 = scmp.eq.s32.totalorder %s20, 0
      %p109 = por %p107, %p108
      %p110 = scmp.ne.s32.totalorder %s96, %s97
      %p111 = scmp.eq.s32.totalorder %s21, 1
      %p112 = por %p110, %p111
      %p114 = scmp.ne.s32.totalorder %s97, %s113
      %p115 = scmp.eq.s32.totalorder %s21, 0
      %p116 = por %p114, %p115
      %p117 = scmp.le.s32.totalorder 1, %s15
      %p118 = scmp.lt.s32.totalorder %s15, 3
      %p119 = pnand %p117, %p118
      %p120 = pneg %p119
      // Predicated region
      $region9: #{tpu_custom_call.1} parent=5 // pred_check
        _
      $region10: #{tpu_custom_call.1} parent=5 // pred_check_branch
        %122 = sbr.rel (%p119) target = $region12
      $region11: #{tpu_custom_call.1} parent=5 // pred_region
        %s123 = ssub.s32 %s15, 1
        // Predicated region
        $region13: #{tpu_custom_call.1} parent=11 // pred_check
          %p124 = pneg %p62
        $region14: #{tpu_custom_call.1} parent=11 // pred_check_branch
          %126 = sbr.rel (%p124) target = $region16
        $region15: #{tpu_custom_call.1} parent=11 // pred_region
          _
        $region16: #{tpu_custom_call.1} parent=11 // pred_fallthru
          _
        // Predicated region
        $region17: #{tpu_custom_call.1} parent=11 // pred_check
          %p127 = pneg %p83
        $region18: #{tpu_custom_call.1} parent=11 // pred_check_branch
          %129 = sbr.rel (%p127) target = $region20
        $region19: #{tpu_custom_call.1} parent=11 // pred_region
          _
        $region20: #{tpu_custom_call.1} parent=11 // pred_fallthru
          _
      $region12: #{tpu_custom_call.1} parent=5 // pred_fallthru
        _
      %p130 = scmp.lt.s32.totalorder %s15, 2
      // Predicated region
      $region21: #{tpu_custom_call.1} parent=5 // pred_check
        %p131 = pneg %p130
      $region22: #{tpu_custom_call.1} parent=5 // pred_check_branch
        %133 = sbr.rel (%p131) target = $region24
      $region23: #{tpu_custom_call.1} parent=5 // pred_region
        // Predicated region
        $region25: #{tpu_custom_call.1} parent=23 // pred_check
          %p134 = pneg %p35
        $region26: #{tpu_custom_call.1} parent=23 // pred_check_branch
          %136 = sbr.rel (%p134) target = $region28
        $region27: #{tpu_custom_call.1} parent=23 // pred_region
          %s137 = sand.u32 %s25, 1
          %s138 = scalar_lea.sflag [#allocation3], %s137
          %s139 = sand.u32 %s25, 1
          %s140 = smul.addr %s139, 8
          %s141 = scalar_lea.vmem [#allocation2], %s140
          %s143 = ssub.s32 128, 128
          %144 = vsyncadd %s138, %s143
          %s145 = smul.addr %s15, 128
          %s146 = scalar_lea.hbm %s0, %s145
          %s148 = sshll.u32 %s141, 4
          %s149 = int_to_ptr.vmem [resolvable:$true] %s148
          %151 = dma.hbm_to_vmem [thread:$0]  %s146, 128, %s149, %s138
        $region28: #{tpu_custom_call.1} parent=23 // pred_fallthru
          _
      $region24: #{tpu_custom_call.1} parent=5 // pred_fallthru
        _
      %p152 = scmp.le.s32.totalorder 1, %s15
      %p153 = scmp.lt.s32.totalorder %s15, 3
      %p154 = pnand %p152, %p153
      %p155 = pneg %p154
      // Predicated region
      $region29: #{tpu_custom_call.1} parent=5 // pred_check
        _
      $region30: #{tpu_custom_call.1} parent=5 // pred_check_branch
        %157 = sbr.rel (%p154) target = $region32
      $region31: #{tpu_custom_call.1} parent=5 // pred_region
        %s158 = ssub.s32 %s15, 1
        %s159 = sand.u32 %s28, 1
        %s160 = scalar_lea.sflag [#allocation3], %s159
        %s161 = sand.u32 %s28, 1
        %s162 = smul.addr %s161, 8
        %s163 = scalar_lea.vmem [#allocation2], %s162
        // Predicated region
        $region33: #{tpu_custom_call.1} parent=31 // pred_check
          %p164 = pneg %p41
        $region34: #{tpu_custom_call.1} parent=31 // pred_check_branch
          %166 = sbr.rel (%p164) target = $region36
        $region35: #{tpu_custom_call.1} parent=31 // pred_region
          %167 = dma.done %s160, 128
        $region36: #{tpu_custom_call.1} parent=31 // pred_fallthru
          _
        %s168 = sand.u32 %s28, 1
        %s169 = scalar_lea.sflag [#allocation3], %s168
        %s170 = sand.u32 %s28, 1
        %s171 = smul.addr %s170, 8
        %s172 = scalar_lea.vmem [#allocation2], %s171
        %p173 = pneg %p41
        %p174 = pneg %p38
        %p175 = pneg %p62
        %p176 = pneg %p59
        %p177 = pneg %p83
        %p178 = pneg %p80
        %p179 = pneg %p109
        %p180 = pneg %p106
        %s181 = sand.u32 %s96, 1
        %s182 = scalar_lea.sflag [#allocation4], %s181
        %s183 = sand.u32 %s96, 1
        %s184 = smul.addr %s183, 8
        %s185 = scalar_lea.vmem [#allocation5], %s184
        %v186 = vld [vmem:[%s163] sm:$0xff]
        %vm187 = vcmask 261120
        %v188 = vsel %vm187, %v186, 0.0
        %189 = vadd.xlane.f32.xlu0 %v188
        %v190 = vpop.xlane.xlu0 %189
        %v191 = vmul.f32 %v190, 0.03125
        %v192 = vsub.f32 %v186, %v191
        %v193 = vmul.f32 %v192, %v192
        %v194 = vsel %vm187, %v193, 0.0
        %195 = vadd.xlane.f32.xlu0 %v194
        %v196 = vpop.xlane.xlu0 %195
        %v197 = vmul.f32 %v196, 0.032258064
        %v198 = vrsqrt.pop %v197
        %v199 = vmul.f32 %v197, %v198
        %vm200 = vcmp.eq.f32.partialorder %v197, inf
        %v201 = vsel %vm200, %v197, %v199
        %vm202 = vcmp.eq.f32.partialorder %v197, 0.0
        %v203 = vand.u32 %v197, 2147483648
        %v204 = vsel %vm202, %v203, %v201
        %v205 = vadd.f32 %v204, 1e-06
        %v206 = vrcp.pop %v205
        %v207 = vmul.f32 1.0, %v206
        %v208 = vmul.f32 %v192, %v207
        %v209 = vld [vmem:[%s1] sm:$0x1]
        %v210 = vld [vmem:[%s2] sm:$0x1]
        %v212 = vlaneseq
        %v213 = vshrl.u32 %v212, 7
        %v214 = vsub.s32 0, %v213
        %v215 = vrot.slane %v209, %v214
        %v217 = vmul.f32 %v215, %v208
        %v219 = vlaneseq
        %v220 = vshrl.u32 %v219, 7
        %v221 = vsub.s32 0, %v220
        %v222 = vrot.slane %v210, %v221
        %v224 = vadd.f32 %v217, %v222
        %225 = vst.msk [vmem:[%s185] sm:$0xff] %vm187, %v224
        %s226 = sand.u32 %s96, 1
        %s227 = scalar_lea.sflag [#allocation4], %s226
        %s228 = sand.u32 %s96, 1
        %s229 = smul.addr %s228, 8
        %s230 = scalar_lea.vmem [#allocation5], %s229
        // Predicated region
        $region37: #{tpu_custom_call.1} parent=31 // pred_check
          %p231 = pneg %p106
        $region38: #{tpu_custom_call.1} parent=31 // pred_check_branch
          %233 = sbr.rel (%p231) target = $region40
        $region39: #{tpu_custom_call.1} parent=31 // pred_region
          %s235 = ssub.s32 128, 128
          %236 = vsyncadd %s227, %s235
          %s237 = smul.addr %s20, 128
          %s238 = scalar_lea.hbm %s3, %s237
          %s240 = sshll.u32 %s230, 4
          %s241 = int_to_ptr.vmem [resolvable:$true] %s240
          %243 = dma.vmem_to_hbm [thread:$0]  %s241, 128, %s238, %s227
        $region40: #{tpu_custom_call.1} parent=31 // pred_fallthru
          _
      $region32: #{tpu_custom_call.1} parent=5 // pred_fallthru
        _
      %p244 = scmp.le.s32.totalorder 2, %s15
      // Predicated region
      $region41: #{tpu_custom_call.1} parent=5 // pred_check
        %p245 = pneg %p244
      $region42: #{tpu_custom_call.1} parent=5 // pred_check_branch
        %247 = sbr.rel (%p245) target = $region44
      $region43: #{tpu_custom_call.1} parent=5 // pred_region
        %s248 = ssub.s32 %s15, 2
        // Predicated region
        $region45: #{tpu_custom_call.1} parent=43 // pred_check
          %p249 = pneg %p112
        $region46: #{tpu_custom_call.1} parent=43 // pred_check_branch
          %251 = sbr.rel (%p249) target = $region48
        $region47: #{tpu_custom_call.1} parent=43 // pred_region
          %s252 = sand.u32 %s97, 1
          %s253 = scalar_lea.sflag [#allocation4], %s252
          %s254 = sand.u32 %s97, 1
          %s255 = smul.addr %s254, 8
          %s256 = scalar_lea.vmem [#allocation5], %s255
          %257 = dma.done %s253, 128
        $region48: #{tpu_custom_call.1} parent=43 // pred_fallthru
          _
      $region44: #{tpu_custom_call.1} parent=5 // pred_fallthru
        _
    $region6: #{tpu_custom_call.1} parent=1 // loop_footer
      %s19 = sadd.s32 1, %s15
    $region7: #{tpu_custom_call.1} parent=1 // loop_footer_branch
      %14 = sbr.rel target = $region3
    $region8: #{tpu_custom_call.1} parent=1 // loop_exit
      _
    %258 = vsyncpa [#allocation3], 1
    %s259 = scalar_lea.sflag [#allocation3], 1
    %260 = vsyncpa %s259, 1
    %261 = vsyncpa [#allocation4], 1
    %s262 = scalar_lea.sflag [#allocation4], 1
    %263 = vsyncpa %s262, 1

</llo_original>
